<compile_context>
chip_gen: v7x
topology: tpu7x:2x2x1
jax: 0.10.0
libtpu: 0.0.40
codegen_flags: <defaults>
</compile_context>

<pallas_src>
import functools

import jax
import jax.numpy as jnp
from jax.experimental import pallas as pl
from jax.experimental.pallas import tpu as pltpu

LANES = 128        # padded feature width (TPU lane count)
BN_EPS = 1e-5


# ----------------------------- Pallas kernel ------------------------------ #

def _fused_gcn_block_kernel(adj_ref, h_ref, w_ref, b_ref, gamma_ref, beta_ref,
                            o_ref, *, num_layers, inv_count):
    """(GCNConv -> BatchNorm1d(train) -> ReLU) x num_layers, fully fused.

    adj_ref   : (B*N, B*N) block-diagonal GCN-normalized adjacency (f32).
    h_ref     : (B*N, LANES) input node features, zero-padded on lane axis.
    w_ref     : (L, LANES, LANES) zero-padded layer weights.
    b_ref     : (L, 1, LANES)   zero-padded GCNConv biases.
    gamma_ref : (L, 1, LANES)   zero-padded BN scale.
    beta_ref  : (L, 1, LANES)   zero-padded BN shift.
    o_ref     : (B*N, LANES)    output (padded channels are exactly zero).
    """
    a = adj_ref[...]            # (BN, BN)
    h = h_ref[...]              # (BN, LANES)

    for l in range(num_layers):                      # tiny static unroll
        # --- GCNConv: one MXU matmul for the linear map, one for the
        #     propagation over the block-diagonal adjacency (whole batch at
        #     once: no per-batch loop, no stack/concat). --------------------- #
        hw = jnp.dot(h, w_ref[l], preferred_element_type=jnp.float32)
        x = jnp.dot(a, hw, preferred_element_type=jnp.float32) + b_ref[l]

        # --- BatchNorm1d training-mode stats over all (batch, node) rows,
        #     biased variance; normalize + affine + ReLU in one VPU pass. ---- #
        mean = jnp.sum(x, axis=0, keepdims=True) * inv_count        # (1, LANES)
        centered = x - mean
        var = jnp.sum(centered * centered, axis=0, keepdims=True) * inv_count
        scale = gamma_ref[l] * jax.lax.rsqrt(var + BN_EPS)          # EUP rsqrt
        h = jnp.maximum(centered * scale + beta_ref[l], 0.0)

    o_ref[...] = h


def fused_weighted_gcn_block(adj_blk, h_flat, w_stack, b_stack, g_stack, be_stack):
    bn, p = h_flat.shape
    num_layers = w_stack.shape[0]
    kernel = functools.partial(_fused_gcn_block_kernel,
                               num_layers=num_layers, inv_count=1.0 / bn)
    return pl.pallas_call(
        kernel,
        out_shape=jax.ShapeDtypeStruct((bn, p), jnp.float32),
        grid=(1,),
        in_specs=[
            pl.BlockSpec((bn, bn), lambda i: (0, 0)),
            pl.BlockSpec((bn, p), lambda i: (0, 0)),
            pl.BlockSpec((num_layers, p, p), lambda i: (0, 0, 0)),
            pl.BlockSpec((num_layers, 1, p), lambda i: (0, 0, 0)),
            pl.BlockSpec((num_layers, 1, p), lambda i: (0, 0, 0)),
            pl.BlockSpec((num_layers, 1, p), lambda i: (0, 0, 0)),
        ],
        out_specs=pl.BlockSpec((bn, p), lambda i: (0, 0)),
        compiler_params=pltpu.CompilerParams(
            dimension_semantics=("arbitrary",),
            vmem_limit_bytes=32 * 1024 * 1024,
        ),
    )(adj_blk, h_flat, w_stack, b_stack, g_stack, be_stack)


# ------------------------------- JAX glue ---------------------------------- #

def gcn_norm_dense(edge_index, edge_weight, num_nodes):
    """Dense GCN-normalized adjacency: A[col, row] = d^-1/2[row]*w*d^-1/2[col].

    Matches PyG gcn_norm with add_self_loops=True (fill value 1).  The example
    graph below contains no pre-existing self-loops, so plain concatenation of
    the loop edges is exact.
    """
    row, col = edge_index[0], edge_index[1]
    loop = jnp.arange(num_nodes, dtype=edge_index.dtype)
    row = jnp.concatenate([row, loop])
    col = jnp.concatenate([col, loop])
    ew = jnp.concatenate(
        [edge_weight.astype(jnp.float32), jnp.ones((num_nodes,), jnp.float32)])
    deg = jnp.zeros((num_nodes,), jnp.float32).at[col].add(ew)
    dinv = jnp.where(deg > 0, jax.lax.rsqrt(deg), 0.0)
    norm = dinv[row] * ew * dinv[col]
    adj = jnp.zeros((num_nodes, num_nodes), jnp.float32).at[col, row].add(norm)
    return adj


def _pad_last(x, target):
    pads = [(0, 0)] * (x.ndim - 1) + [(0, target - x.shape[-1])]
    return jnp.pad(x, pads)


def init_weighted_gcn_block(key, in_features, hidden_sizes, out_features):
    """Deterministic synthetic parameters, same shapes as the PyTorch module."""
    dims = [in_features] + list(hidden_sizes) + [out_features]
    params = []
    for fin, fout in zip(dims[:-1], dims[1:]):
        key, kw, kb = jax.random.split(key, 3)
        limit = jnp.sqrt(6.0 / (fin + fout))              # glorot
        w = jax.random.uniform(kw, (fin, fout), jnp.float32, -limit, limit)
        b = 0.01 * jax.random.normal(kb, (1, fout), jnp.float32)
        gamma = jnp.ones((1, fout), jnp.float32)          # BatchNorm1d defaults
        beta = jnp.zeros((1, fout), jnp.float32)
        params.append((w, b, gamma, beta))
    return params


@functools.partial(jax.jit, static_argnums=(3,))
def weighted_gcn_block_forward(node_features, edge_index, edges_weight, num_nodes,
                               *flat_params):
    B, N, fin = node_features.shape
    num_layers = len(flat_params) // 4
    out_f = flat_params[4 * (num_layers - 1)].shape[1]

    # Dense GCN-normalized adjacency, replicated block-diagonally over batch so
    # message passing for the whole batch is a single 2-D matmul.
    adj = gcn_norm_dense(edge_index, edges_weight, num_nodes)
    adj_blk = jnp.kron(jnp.eye(B, dtype=adj.dtype), adj)            # (B*N, B*N)
    # TODO(synk): for large N (or B) tile the adjacency over target-node blocks
    # (v7x has only 64 MiB VMEM) and split BN into a two-pass reduce so a
    # "parallel" grid axis can feed both v7x TensorCores.

    # Flat batch-major activations, zero-padded to a lane-dense 128-wide tile.
    h_flat = _pad_last(node_features.reshape(B * N, fin).astype(jnp.float32),
                       LANES)

    # Stack per-layer params into uniform zero-padded tensors.
    w_stack = jnp.stack([
        jnp.pad(flat_params[4 * l].astype(jnp.float32),
                ((0, LANES - flat_params[4 * l].shape[0]),
                 (0, LANES - flat_params[4 * l].shape[1])))
        for l in range(num_layers)])                                # (L, P, P)
    b_stack = jnp.stack([_pad_last(flat_params[4 * l + 1].astype(jnp.float32),
                                   LANES) for l in range(num_layers)])
    g_stack = jnp.stack([_pad_last(flat_params[4 * l + 2].astype(jnp.float32),
                                   LANES) for l in range(num_layers)])
    be_stack = jnp.stack([_pad_last(flat_params[4 * l + 3].astype(jnp.float32),
                                    LANES) for l in range(num_layers)])

    out = fused_weighted_gcn_block(adj_blk, h_flat, w_stack, b_stack,
                                   g_stack, be_stack)               # (B*N, P)
    return out.reshape(B, N, LANES)[:, :, :out_f]


# --------------------------------- main ------------------------------------ #

if __name__ == "__main__":
    B, N = 2, 16                      # batch, nodes
    IN_F, HIDDEN, OUT_F = 8, [16, 32], 16
    E = 40                            # directed edges (no self loops)

    key = jax.random.PRNGKey(0)
    k_x, k_src, k_off, k_w, k_params = jax.random.split(key, 5)

    node_features = jax.random.normal(k_x, (B, N, IN_F), jnp.float32)

    src = jax.random.randint(k_src, (E,), 0, N, jnp.int32)
    off = jax.random.randint(k_off, (E,), 1, N, jnp.int32)   # guarantees dst != src
    dst = (src + off) % N
    edge_index = jnp.stack([src, dst], axis=0)                # (2, E)
    edges_weight = jax.random.uniform(k_w, (E,), jnp.float32, 0.1, 1.0)

    params = init_weighted_gcn_block(k_params, IN_F, HIDDEN, OUT_F)
    flat = [p for layer in params for p in layer]

    out = weighted_gcn_block_forward(node_features, edge_index, edges_weight, N,
                                     *flat)
    out = jax.block_until_ready(out)

    assert out.shape == (B, N, OUT_F), out.shape
    assert bool(jnp.all(jnp.isfinite(out)))
    assert bool(jnp.all(out >= 0.0))          # ReLU output
    print("KERNEL_OK")
</pallas_src>

<mosaic_0001>
module attributes {stable_mosaic.version = 11 : i64} {
  func.func @_fused_gcn_block_kernel(%arg0: i32, %arg1: memref<32x32xf32, #tpu.memory_space<vmem>>, %arg2: memref<32x128xf32, #tpu.memory_space<vmem>>, %arg3: memref<3x128x128xf32, #tpu.memory_space<vmem>>, %arg4: memref<3x1x128xf32, #tpu.memory_space<vmem>>, %arg5: memref<3x1x128xf32, #tpu.memory_space<vmem>>, %arg6: memref<3x1x128xf32, #tpu.memory_space<vmem>>, %arg7: memref<32x128xf32, #tpu.memory_space<vmem>>) attributes {dimension_semantics = [#tpu.dimension_semantics<arbitrary>], iteration_bounds = array<i64: 1>, scalar_prefetch = 0 : i64, scratch_operands = 0 : i64, tpu.core_type = #tpu.core_type<tc>, window_params = [{pipeline_mode = #tpu.pipeline_mode<synchronous>, transform_indices = @transform_0, window_bounds = array<i64: 32, 32>}, {pipeline_mode = #tpu.pipeline_mode<synchronous>, transform_indices = @transform_1, window_bounds = array<i64: 32, 128>}, {pipeline_mode = #tpu.pipeline_mode<synchronous>, transform_indices = @transform_2, window_bounds = array<i64: 3, 128, 128>}, {pipeline_mode = #tpu.pipeline_mode<synchronous>, transform_indices = @transform_3, window_bounds = array<i64: 3, 1, 128>}, {pipeline_mode = #tpu.pipeline_mode<synchronous>, transform_indices = @transform_4, window_bounds = array<i64: 3, 1, 128>}, {pipeline_mode = #tpu.pipeline_mode<synchronous>, transform_indices = @transform_5, window_bounds = array<i64: 3, 1, 128>}, {pipeline_mode = #tpu.pipeline_mode<synchronous>, transform_indices = @transform_6, window_bounds = array<i64: 32, 128>}]} {
    %c0 = arith.constant 0 : index
    %c0_0 = arith.constant 0 : index
    %0 = vector.load %arg1[%c0, %c0_0] : memref<32x32xf32, #tpu.memory_space<vmem>>, vector<32x32xf32>
    %c0_1 = arith.constant 0 : index
    %c0_2 = arith.constant 0 : index
    %1 = vector.load %arg2[%c0_1, %c0_2] : memref<32x128xf32, #tpu.memory_space<vmem>>, vector<32x128xf32>
    %c0_3 = arith.constant 0 : index
    %c0_4 = arith.constant 0 : index
    %c0_5 = arith.constant 0 : index
    %2 = vector.load %arg3[%c0_3, %c0_4, %c0_5] : memref<3x128x128xf32, #tpu.memory_space<vmem>>, vector<1x128x128xf32>
    %3 = vector.shape_cast %2 : vector<1x128x128xf32> to vector<128x128xf32>
    %cst = arith.constant dense<0.000000e+00> : vector<32x128xf32>
    %4 = tpu.matmul %1, %3, %cst {dimension_numbers = #tpu.dot_dimension_numbers<[1], [0], [0], [1], [0, 0, 1, 1], [], []>} : vector<32x128xf32>, vector<128x128xf32>, vector<32x128xf32> -> vector<32x128xf32>
    %cst_6 = arith.constant dense<0.000000e+00> : vector<32x128xf32>
    %5 = tpu.matmul %0, %4, %cst_6 {dimension_numbers = #tpu.dot_dimension_numbers<[1], [0], [0], [1], [0, 0, 1, 1], [], []>} : vector<32x32xf32>, vector<32x128xf32>, vector<32x128xf32> -> vector<32x128xf32>
    %c0_7 = arith.constant 0 : index
    %c0_8 = arith.constant 0 : index
    %c0_9 = arith.constant 0 : index
    %6 = vector.load %arg4[%c0_7, %c0_8, %c0_9] : memref<3x1x128xf32, #tpu.memory_space<vmem>>, vector<1x1x128xf32>
    %7 = vector.shape_cast %6 : vector<1x1x128xf32> to vector<1x128xf32>
    %8 = vector.broadcast %7 : vector<1x128xf32> to vector<32x128xf32>
    %9 = arith.addf %5, %8 : vector<32x128xf32>
    %cst_10 = arith.constant dense<0.000000e+00> : vector<128xf32>
    %10 = vector.multi_reduction <add>, %9, %cst_10 [0] : vector<32x128xf32> to vector<128xf32>
    %11 = vector.shape_cast %10 : vector<128xf32> to vector<1x128xf32>
    %cst_11 = arith.constant 3.125000e-02 : f32
    %12 = vector.broadcast %cst_11 : f32 to vector<1x128xf32>
    %13 = arith.mulf %11, %12 : vector<1x128xf32>
    %14 = vector.broadcast %13 : vector<1x128xf32> to vector<32x128xf32>
    %15 = arith.subf %9, %14 : vector<32x128xf32>
    %16 = arith.mulf %15, %15 : vector<32x128xf32>
    %cst_12 = arith.constant dense<0.000000e+00> : vector<128xf32>
    %17 = vector.multi_reduction <add>, %16, %cst_12 [0] : vector<32x128xf32> to vector<128xf32>
    %18 = vector.shape_cast %17 : vector<128xf32> to vector<1x128xf32>
    %cst_13 = arith.constant 3.125000e-02 : f32
    %19 = vector.broadcast %cst_13 : f32 to vector<1x128xf32>
    %20 = arith.mulf %18, %19 : vector<1x128xf32>
    %c0_14 = arith.constant 0 : index
    %c0_15 = arith.constant 0 : index
    %c0_16 = arith.constant 0 : index
    %21 = vector.load %arg5[%c0_14, %c0_15, %c0_16] : memref<3x1x128xf32, #tpu.memory_space<vmem>>, vector<1x1x128xf32>
    %22 = vector.shape_cast %21 : vector<1x1x128xf32> to vector<1x128xf32>
    %cst_17 = arith.constant 9.99999974E-6 : f32
    %23 = vector.broadcast %cst_17 : f32 to vector<1x128xf32>
    %24 = arith.addf %20, %23 : vector<1x128xf32>
    %25 = math.rsqrt %24 : vector<1x128xf32>
    %26 = arith.mulf %22, %25 : vector<1x128xf32>
    %27 = vector.broadcast %26 : vector<1x128xf32> to vector<32x128xf32>
    %28 = arith.mulf %15, %27 : vector<32x128xf32>
    %c0_18 = arith.constant 0 : index
    %c0_19 = arith.constant 0 : index
    %c0_20 = arith.constant 0 : index
    %29 = vector.load %arg6[%c0_18, %c0_19, %c0_20] : memref<3x1x128xf32, #tpu.memory_space<vmem>>, vector<1x1x128xf32>
    %30 = vector.shape_cast %29 : vector<1x1x128xf32> to vector<1x128xf32>
    %31 = vector.broadcast %30 : vector<1x128xf32> to vector<32x128xf32>
    %32 = arith.addf %28, %31 : vector<32x128xf32>
    %cst_21 = arith.constant 0.000000e+00 : f32
    %33 = vector.broadcast %cst_21 : f32 to vector<32x128xf32>
    %34 = arith.maximumf %32, %33 : vector<32x128xf32>
    %c1 = arith.constant 1 : index
    %c0_22 = arith.constant 0 : index
    %c0_23 = arith.constant 0 : index
    %35 = vector.load %arg3[%c1, %c0_22, %c0_23] : memref<3x128x128xf32, #tpu.memory_space<vmem>>, vector<1x128x128xf32>
    %36 = vector.shape_cast %35 : vector<1x128x128xf32> to vector<128x128xf32>
    %cst_24 = arith.constant dense<0.000000e+00> : vector<32x128xf32>
    %37 = tpu.matmul %34, %36, %cst_24 {dimension_numbers = #tpu.dot_dimension_numbers<[1], [0], [0], [1], [0, 0, 1, 1], [], []>} : vector<32x128xf32>, vector<128x128xf32>, vector<32x128xf32> -> vector<32x128xf32>
    %cst_25 = arith.constant dense<0.000000e+00> : vector<32x128xf32>
    %38 = tpu.matmul %0, %37, %cst_25 {dimension_numbers = #tpu.dot_dimension_numbers<[1], [0], [0], [1], [0, 0, 1, 1], [], []>} : vector<32x32xf32>, vector<32x128xf32>, vector<32x128xf32> -> vector<32x128xf32>
    %c1_26 = arith.constant 1 : index
    %c0_27 = arith.constant 0 : index
    %c0_28 = arith.constant 0 : index
    %39 = vector.load %arg4[%c1_26, %c0_27, %c0_28] : memref<3x1x128xf32, #tpu.memory_space<vmem>>, vector<1x1x128xf32>
    %40 = vector.shape_cast %39 : vector<1x1x128xf32> to vector<1x128xf32>
    %41 = vector.broadcast %40 : vector<1x128xf32> to vector<32x128xf32>
    %42 = arith.addf %38, %41 : vector<32x128xf32>
    %cst_29 = arith.constant dense<0.000000e+00> : vector<128xf32>
    %43 = vector.multi_reduction <add>, %42, %cst_29 [0] : vector<32x128xf32> to vector<128xf32>
    %44 = vector.shape_cast %43 : vector<128xf32> to vector<1x128xf32>
    %cst_30 = arith.constant 3.125000e-02 : f32
    %45 = vector.broadcast %cst_30 : f32 to vector<1x128xf32>
    %46 = arith.mulf %44, %45 : vector<1x128xf32>
    %47 = vector.broadcast %46 : vector<1x128xf32> to vector<32x128xf32>
    %48 = arith.subf %42, %47 : vector<32x128xf32>
    %49 = arith.mulf %48, %48 : vector<32x128xf32>
    %cst_31 = arith.constant dense<0.000000e+00> : vector<128xf32>
    %50 = vector.multi_reduction <add>, %49, %cst_31 [0] : vector<32x128xf32> to vector<128xf32>
    %51 = vector.shape_cast %50 : vector<128xf32> to vector<1x128xf32>
    %cst_32 = arith.constant 3.125000e-02 : f32
    %52 = vector.broadcast %cst_32 : f32 to vector<1x128xf32>
    %53 = arith.mulf %51, %52 : vector<1x128xf32>
    %c1_33 = arith.constant 1 : index
    %c0_34 = arith.constant 0 : index
    %c0_35 = arith.constant 0 : index
    %54 = vector.load %arg5[%c1_33, %c0_34, %c0_35] : memref<3x1x128xf32, #tpu.memory_space<vmem>>, vector<1x1x128xf32>
    %55 = vector.shape_cast %54 : vector<1x1x128xf32> to vector<1x128xf32>
    %cst_36 = arith.constant 9.99999974E-6 : f32
    %56 = vector.broadcast %cst_36 : f32 to vector<1x128xf32>
    %57 = arith.addf %53, %56 : vector<1x128xf32>
    %58 = math.rsqrt %57 : vector<1x128xf32>
    %59 = arith.mulf %55, %58 : vector<1x128xf32>
    %60 = vector.broadcast %59 : vector<1x128xf32> to vector<32x128xf32>
    %61 = arith.mulf %48, %60 : vector<32x128xf32>
    %c1_37 = arith.constant 1 : index
    %c0_38 = arith.constant 0 : index
    %c0_39 = arith.constant 0 : index
    %62 = vector.load %arg6[%c1_37, %c0_38, %c0_39] : memref<3x1x128xf32, #tpu.memory_space<vmem>>, vector<1x1x128xf32>
    %63 = vector.shape_cast %62 : vector<1x1x128xf32> to vector<1x128xf32>
    %64 = vector.broadcast %63 : vector<1x128xf32> to vector<32x128xf32>
    %65 = arith.addf %61, %64 : vector<32x128xf32>
    %cst_40 = arith.constant 0.000000e+00 : f32
    %66 = vector.broadcast %cst_40 : f32 to vector<32x128xf32>
    %67 = arith.maximumf %65, %66 : vector<32x128xf32>
    %c2 = arith.constant 2 : index
    %c0_41 = arith.constant 0 : index
    %c0_42 = arith.constant 0 : index
    %68 = vector.load %arg3[%c2, %c0_41, %c0_42] : memref<3x128x128xf32, #tpu.memory_space<vmem>>, vector<1x128x128xf32>
    %69 = vector.shape_cast %68 : vector<1x128x128xf32> to vector<128x128xf32>
    %cst_43 = arith.constant dense<0.000000e+00> : vector<32x128xf32>
    %70 = tpu.matmul %67, %69, %cst_43 {dimension_numbers = #tpu.dot_dimension_numbers<[1], [0], [0], [1], [0, 0, 1, 1], [], []>} : vector<32x128xf32>, vector<128x128xf32>, vector<32x128xf32> -> vector<32x128xf32>
    %cst_44 = arith.constant dense<0.000000e+00> : vector<32x128xf32>
    %71 = tpu.matmul %0, %70, %cst_44 {dimension_numbers = #tpu.dot_dimension_numbers<[1], [0], [0], [1], [0, 0, 1, 1], [], []>} : vector<32x32xf32>, vector<32x128xf32>, vector<32x128xf32> -> vector<32x128xf32>
    %c2_45 = arith.constant 2 : index
    %c0_46 = arith.constant 0 : index
    %c0_47 = arith.constant 0 : index
    %72 = vector.load %arg4[%c2_45, %c0_46, %c0_47] : memref<3x1x128xf32, #tpu.memory_space<vmem>>, vector<1x1x128xf32>
    %73 = vector.shape_cast %72 : vector<1x1x128xf32> to vector<1x128xf32>
    %74 = vector.broadcast %73 : vector<1x128xf32> to vector<32x128xf32>
    %75 = arith.addf %71, %74 : vector<32x128xf32>
    %cst_48 = arith.constant dense<0.000000e+00> : vector<128xf32>
    %76 = vector.multi_reduction <add>, %75, %cst_48 [0] : vector<32x128xf32> to vector<128xf32>
    %77 = vector.shape_cast %76 : vector<128xf32> to vector<1x128xf32>
    %cst_49 = arith.constant 3.125000e-02 : f32
    %78 = vector.broadcast %cst_49 : f32 to vector<1x128xf32>
    %79 = arith.mulf %77, %78 : vector<1x128xf32>
    %80 = vector.broadcast %79 : vector<1x128xf32> to vector<32x128xf32>
    %81 = arith.subf %75, %80 : vector<32x128xf32>
    %82 = arith.mulf %81, %81 : vector<32x128xf32>
    %cst_50 = arith.constant dense<0.000000e+00> : vector<128xf32>
    %83 = vector.multi_reduction <add>, %82, %cst_50 [0] : vector<32x128xf32> to vector<128xf32>
    %84 = vector.shape_cast %83 : vector<128xf32> to vector<1x128xf32>
    %cst_51 = arith.constant 3.125000e-02 : f32
    %85 = vector.broadcast %cst_51 : f32 to vector<1x128xf32>
    %86 = arith.mulf %84, %85 : vector<1x128xf32>
    %c2_52 = arith.constant 2 : index
    %c0_53 = arith.constant 0 : index
    %c0_54 = arith.constant 0 : index
    %87 = vector.load %arg5[%c2_52, %c0_53, %c0_54] : memref<3x1x128xf32, #tpu.memory_space<vmem>>, vector<1x1x128xf32>
    %88 = vector.shape_cast %87 : vector<1x1x128xf32> to vector<1x128xf32>
    %cst_55 = arith.constant 9.99999974E-6 : f32
    %89 = vector.broadcast %cst_55 : f32 to vector<1x128xf32>
    %90 = arith.addf %86, %89 : vector<1x128xf32>
    %91 = math.rsqrt %90 : vector<1x128xf32>
    %92 = arith.mulf %88, %91 : vector<1x128xf32>
    %93 = vector.broadcast %92 : vector<1x128xf32> to vector<32x128xf32>
    %94 = arith.mulf %81, %93 : vector<32x128xf32>
    %c2_56 = arith.constant 2 : index
    %c0_57 = arith.constant 0 : index
    %c0_58 = arith.constant 0 : index
    %95 = vector.load %arg6[%c2_56, %c0_57, %c0_58] : memref<3x1x128xf32, #tpu.memory_space<vmem>>, vector<1x1x128xf32>
    %96 = vector.shape_cast %95 : vector<1x1x128xf32> to vector<1x128xf32>
    %97 = vector.broadcast %96 : vector<1x128xf32> to vector<32x128xf32>
    %98 = arith.addf %94, %97 : vector<32x128xf32>
    %cst_59 = arith.constant 0.000000e+00 : f32
    %99 = vector.broadcast %cst_59 : f32 to vector<32x128xf32>
    %100 = arith.maximumf %98, %99 : vector<32x128xf32>
    %c0_60 = arith.constant 0 : index
    %c0_61 = arith.constant 0 : index
    %101 = vector.load %arg7[%c0_60, %c0_61] : memref<32x128xf32, #tpu.memory_space<vmem>>, vector<32x128xf32>
    tpu.vector_store %arg7[%c0_60, %c0_61], %100 {strides = array<i32>} : memref<32x128xf32, #tpu.memory_space<vmem>>, vector<32x128xf32>,
    return
  }
  func.func @transform_0(%arg0: i32) -> (i32, i32) {
    %c0_i32 = arith.constant 0 : i32
    %c0_i32_0 = arith.constant 0 : i32
    %c0_i32_1 = arith.constant 0 : i32
    return %c0_i32, %c0_i32_0 : i32, i32
  }
  func.func @transform_1(%arg0: i32) -> (i32, i32) {
    %c0_i32 = arith.constant 0 : i32
    %c0_i32_0 = arith.constant 0 : i32
    %c0_i32_1 = arith.constant 0 : i32
    return %c0_i32, %c0_i32_0 : i32, i32
  }
  func.func @transform_2(%arg0: i32) -> (i32, i32, i32) {
    %c0_i32 = arith.constant 0 : i32
    %c0_i32_0 = arith.constant 0 : i32
    %c0_i32_1 = arith.constant 0 : i32
    %c0_i32_2 = arith.constant 0 : i32
    return %c0_i32, %c0_i32_0, %c0_i32_1 : i32, i32, i32
  }
  func.func @transform_3(%arg0: i32) -> (i32, i32, i32) {
    %c0_i32 = arith.constant 0 : i32
    %c0_i32_0 = arith.constant 0 : i32
    %c0_i32_1 = arith.constant 0 : i32
    %c0_i32_2 = arith.constant 0 : i32
    return %c0_i32, %c0_i32_0, %c0_i32_1 : i32, i32, i32
  }
  func.func @transform_4(%arg0: i32) -> (i32, i32, i32) {
    %c0_i32 = arith.constant 0 : i32
    %c0_i32_0 = arith.constant 0 : i32
    %c0_i32_1 = arith.constant 0 : i32
    %c0_i32_2 = arith.constant 0 : i32
    return %c0_i32, %c0_i32_0, %c0_i32_1 : i32, i32, i32
  }
  func.func @transform_5(%arg0: i32) -> (i32, i32, i32) {
    %c0_i32 = arith.constant 0 : i32
    %c0_i32_0 = arith.constant 0 : i32
    %c0_i32_1 = arith.constant 0 : i32
    %c0_i32_2 = arith.constant 0 : i32
    return %c0_i32, %c0_i32_0, %c0_i32_1 : i32, i32, i32
  }
  func.func @transform_6(%arg0: i32) -> (i32, i32) {
    %c0_i32 = arith.constant 0 : i32
    %c0_i32_0 = arith.constant 0 : i32
    %c0_i32_1 = arith.constant 0 : i32
    return %c0_i32, %c0_i32_0 : i32, i32
  }
}

</mosaic_0001>

<llo_original>
// kernel: weighted_gcn_block_forward.1
$region0: #{weighted_gcn_block_forward.1}
  #allocation0 [shape = 'u32[]', space=smem, size = 0x4, offset = 0x4, fixed_abs, tag = 'smem constant byte address 0x4 - core index']
  #allocation1 [shape = 'u32[144,128]{1,0:T(1,128)}', space=vmem, size = 0x12000, scoped, tag = 'internal scratch']
  %s0 = inlined_call_operand.vmem [shape: f32[32,32], index: 0, kind: input, shape index: {}]
  %s1 = inlined_call_operand.vmem [shape: f32[32,128], index: 1, kind: input, shape index: {}]
  %s2 = inlined_call_operand.vmem [shape: f32[3,128,128], index: 2, kind: input, shape index: {}]
  %s3 = inlined_call_operand.vmem [shape: f32[3,1,128], index: 3, kind: input, shape index: {}]
  %s4 = inlined_call_operand.vmem [shape: f32[3,1,128], index: 4, kind: input, shape index: {}]
  %s5 = inlined_call_operand.vmem [shape: f32[3,1,128], index: 5, kind: input, shape index: {}]
  %s6 = inlined_call_operand.hbm [shape: f32[32,128], index: 6, kind: output, shape index: {}]
  %s7 = sld [smem:[#allocation0]]
  $region34: #{weighted_gcn_block_forward.1} parent=0
    _
  %s9 = ssub.s32 1, %s7
  %s10 = scalar_select 0, %s9, %s7
  $region1: #{weighted_gcn_block_forward.1} parent=0
    #allocation2 [shape = 'u8[16384]{0}', space=vmem, size = 0x4000, scoped, tag = 'output window, operand 0, single buffered']
    #allocation3 [shape = 's32[1]{0}', space=sflag, size = 0x4, scoped, tag = 'scoped memory for weighted_gcn_block_forward.1']
    %11 = vsyncpa [#allocation3], 0
    // Predicated region
    $region2: #{weighted_gcn_block_forward.1} parent=1 // pred_check
      _
    $region3: #{weighted_gcn_block_forward.1} parent=1 // pred_check_branch
      %13 = sbr.rel (0) target = $region5
    $region4: #{weighted_gcn_block_forward.1} parent=1 // pred_region
      _
    $region5: #{weighted_gcn_block_forward.1} parent=1 // pred_fallthru
      _
    // Predicated region
    $region6: #{weighted_gcn_block_forward.1} parent=1 // pred_check
      _
    $region7: #{weighted_gcn_block_forward.1} parent=1 // pred_check_branch
      %15 = sbr.rel (0) target = $region9
    $region8: #{weighted_gcn_block_forward.1} parent=1 // pred_region
      _
    $region9: #{weighted_gcn_block_forward.1} parent=1 // pred_fallthru
      _
    // Predicated region
    $region10: #{weighted_gcn_block_forward.1} parent=1 // pred_check
      _
    $region11: #{weighted_gcn_block_forward.1} parent=1 // pred_check_branch
      %17 = sbr.rel (0) target = $region13
    $region12: #{weighted_gcn_block_forward.1} parent=1 // pred_region
      _
    $region13: #{weighted_gcn_block_forward.1} parent=1 // pred_fallthru
      _
    // Predicated region
    $region14: #{weighted_gcn_block_forward.1} parent=1 // pred_check
      _
    $region15: #{weighted_gcn_block_forward.1} parent=1 // pred_check_branch
      %19 = sbr.rel (0) target = $region17
    $region16: #{weighted_gcn_block_forward.1} parent=1 // pred_region
      _
    $region17: #{weighted_gcn_block_forward.1} parent=1 // pred_fallthru
      _
    // Predicated region
    $region18: #{weighted_gcn_block_forward.1} parent=1 // pred_check
      _
    $region19: #{weighted_gcn_block_forward.1} parent=1 // pred_check_branch
      %21 = sbr.rel (0) target = $region21
    $region20: #{weighted_gcn_block_forward.1} parent=1 // pred_region
      _
    $region21: #{weighted_gcn_block_forward.1} parent=1 // pred_fallthru
      _
    // Predicated region
    $region22: #{weighted_gcn_block_forward.1} parent=1 // pred_check
      _
    $region23: #{weighted_gcn_block_forward.1} parent=1 // pred_check_branch
      %23 = sbr.rel (0) target = $region25
    $region24: #{weighted_gcn_block_forward.1} parent=1 // pred_region
      _
    $region25: #{weighted_gcn_block_forward.1} parent=1 // pred_fallthru
      _
    %v24 = vld [vmem:[%s0] sm:$0xff]
    %v25 = vld [vmem:[%s0 + $0x8] sm:$0xff]
    %v26 = vld [vmem:[%s0 + $0x10] sm:$0xff]
    %v27 = vld [vmem:[%s0 + $0x18] sm:$0xff]
    %v28 = vld [vmem:[%s1] sm:$0xff]
    %v29 = vld [vmem:[%s1 + $0x8] sm:$0xff]
    %v30 = vld [vmem:[%s1 + $0x10] sm:$0xff]
    %v31 = vld [vmem:[%s1 + $0x18] sm:$0xff]
    %v32 = vld [vmem:[%s2] sm:$0xff]
    %v33 = vld [vmem:[%s2 + $0x8] sm:$0xff]
    %v34 = vld [vmem:[%s2 + $0x10] sm:$0xff]
    %v35 = vld [vmem:[%s2 + $0x18] sm:$0xff]
    %v36 = vld [vmem:[%s2 + $0x20] sm:$0xff]
    %v37 = vld [vmem:[%s2 + $0x28] sm:$0xff]
    %v38 = vld [vmem:[%s2 + $0x30] sm:$0xff]
    %v39 = vld [vmem:[%s2 + $0x38] sm:$0xff]
    %v40 = vld [vmem:[%s2 + $0x40] sm:$0xff]
    %v41 = vld [vmem:[%s2 + $0x48] sm:$0xff]
    %v42 = vld [vmem:[%s2 + $0x50] sm:$0xff]
    %v43 = vld [vmem:[%s2 + $0x58] sm:$0xff]
    %v44 = vld [vmem:[%s2 + $0x60] sm:$0xff]
    %v45 = vld [vmem:[%s2 + $0x68] sm:$0xff]
    %v46 = vld [vmem:[%s2 + $0x70] sm:$0xff]
    %v47 = vld [vmem:[%s2 + $0x78] sm:$0xff]
    %48 = vmatprep.subr.mxu0 0.0
    %49 = vmatpush1.msra.mxu0 %v32
    %50 = vmatprep.subr.mxu0 0.0
    %51 = vmatpush1.msra.mxu0 %v33
    %52 = vmatprep.subr.mxu0 0.0
    %53 = vmatpush1.msra.mxu0 %v34
    %54 = vmatprep.subr.mxu0 0.0
    %55 = vmatpush1.msra.mxu0 %v35
    %56 = vmatprep.subr.mxu0 0.0
    %57 = vmatpush1.msra.mxu0 %v36
    %58 = vmatprep.subr.mxu0 0.0
    %59 = vmatpush1.msra.mxu0 %v37
    %60 = vmatprep.subr.mxu0 0.0
    %61 = vmatpush1.msra.mxu0 %v38
    %62 = vmatprep.subr.mxu0 0.0
    %63 = vmatpush1.msra.mxu0 %v39
    %64 = vmatprep.subr.mxu0 0.0
    %65 = vmatpush1.msra.mxu0 %v40
    %66 = vmatprep.subr.mxu0 0.0
    %67 = vmatpush1.msra.mxu0 %v41
    %68 = vmatprep.subr.mxu0 0.0
    %69 = vmatpush1.msra.mxu0 %v42
    %70 = vmatprep.subr.mxu0 0.0
    %71 = vmatpush1.msra.mxu0 %v43
    %72 = vmatprep.subr.mxu0 0.0
    %73 = vmatpush1.msra.mxu0 %v44
    %74 = vmatprep.subr.mxu0 0.0
    %75 = vmatpush1.msra.mxu0 %v45
    %76 = vmatprep.subr.mxu0 0.0
    %77 = vmatpush1.msra.mxu0 %v46
    %78 = vmatprep.subr.mxu0 0.0
    %79 = vmatpush1.msra.mxu0 %v47
    %80 = vmatprep.subr.mxu0 0.0
    %81 = vmatpush1.msra.mxu0 0.0
    %82 = vmatprep.subr.mxu0 0.0
    %83 = vmatpush1.msra.mxu0 0.0
    %84 = vmatprep.subr.mxu0 0.0
    %85 = vmatpush1.msra.mxu0 0.0
    %86 = vmatprep.subr.mxu0 0.0
    %87 = vmatpush1.msra.mxu0 0.0
    %88 = vmatprep.subr.mxu0 0.0
    %89 = vmatpush1.msra.mxu0 0.0
    %90 = vmatprep.subr.mxu0 0.0
    %91 = vmatpush1.msra.mxu0 0.0
    %92 = vmatprep.subr.mxu0 0.0
    %93 = vmatpush1.msra.mxu0 0.0
    %94 = vmatprep.subr.mxu0 0.0
    %95 = vmatpush1.msra.mxu0 0.0
    %96 = vmatprep.subr.mxu0 0.0
    %97 = vmatpush1.msra.mxu0 0.0
    %98 = vmatprep.subr.mxu0 0.0
    %99 = vmatpush1.msra.mxu0 0.0
    %100 = vmatprep.subr.mxu0 0.0
    %101 = vmatpush1.msra.mxu0 0.0
    %102 = vmatprep.subr.mxu0 0.0
    %103 = vmatpush1.msra.mxu0 0.0
    %104 = vmatprep.subr.mxu0 0.0
    %105 = vmatpush1.msra.mxu0 0.0
    %106 = vmatprep.subr.mxu0 0.0
    %107 = vmatpush1.msra.mxu0 0.0
    %108 = vmatprep.subr.mxu0 0.0
    %109 = vmatpush1.msra.mxu0 0.0
    %110 = vmatprep.subr.mxu0 0.0
    %111 = vmatpush1.msra.mxu0 0.0
    %112 = vmatprep.mubr.f32.mxu0 0.0
    %113 = vmatmul.mubr.f32.gmra.mrb[0].mxu0 %v28
    %v114 = vpop.f32.mrb[0].mxu0
    %v115 = vadd.f32 0.0, %v114
    %v116 = vpop.f32.mrb[0].mxu0
    %117 = vmatprep.mubr.f32.mxu0 0.0
    %118 = vmatmul.mubr.f32.gmra.mrb[0].mxu0 %v29
    %v119 = vpop.f32.mrb[0].mxu0
    %v120 = vadd.f32 0.0, %v119
    %v121 = vpop.f32.mrb[0].mxu0
    %122 = vmatprep.mubr.f32.mxu0 0.0
    %123 = vmatmul.mubr.f32.gmra.mrb[0].mxu0 %v30
    %v124 = vpop.f32.mrb[0].mxu0
    %v125 = vadd.f32 0.0, %v124
    %v126 = vpop.f32.mrb[0].mxu0
    %127 = vmatprep.mubr.f32.mxu0 0.0
    %128 = vmatmul.mubr.f32.gmra.mrb[0].mxu0 %v31
    %v129 = vpop.f32.mrb[0].mxu0
    %v130 = vadd.f32 0.0, %v129
    %v131 = vpop.f32.mrb[0].mxu0
    %132 = vdwg.mxu0
    %v133 = vld [vmem:[%s3] sm:$0x1]
    %v135 = vlaneseq
    %v136 = vshrl.u32 %v135, 7
    %v137 = vsub.s32 0, %v136
    %v138 = vrot.slane %v133, %v137
    %vm140 = vcmask 261120
    %v142 = vsel %vm140, %v24, 0
    %v145 = vsel %vm140, %v25, 0
    %v148 = vsel %vm140, %v26, 0
    %v151 = vsel %vm140, %v27, 0
    %153 = vmatprep.subr.mxu0 0.0
    %154 = vmatpush1.msra.mxu0 %v115
    %155 = vmatprep.subr.mxu0 0.0
    %156 = vmatpush1.msra.mxu0 %v120
    %157 = vmatprep.subr.mxu0 0.0
    %158 = vmatpush1.msra.mxu0 %v125
    %159 = vmatprep.subr.mxu0 0.0
    %160 = vmatpush1.msra.mxu0 %v130
    %161 = vmatprep.subr.mxu0 0.0
    %162 = vmatpush1.msra.mxu0 0.0
    %163 = vmatprep.subr.mxu0 0.0
    %164 = vmatpush1.msra.mxu0 0.0
    %165 = vmatprep.subr.mxu0 0.0
    %166 = vmatpush1.msra.mxu0 0.0
    %167 = vmatprep.subr.mxu0 0.0
    %168 = vmatpush1.msra.mxu0 0.0
    %169 = vmatprep.subr.mxu0 0.0
    %170 = vmatpush1.msra.mxu0 0.0
    %171 = vmatprep.subr.mxu0 0.0
    %172 = vmatpush1.msra.mxu0 0.0
    %173 = vmatprep.subr.mxu0 0.0
    %174 = vmatpush1.msra.mxu0 0.0
    %175 = vmatprep.subr.mxu0 0.0
    %176 = vmatpush1.msra.mxu0 0.0
    %177 = vmatprep.subr.mxu0 0.0
    %178 = vmatpush1.msra.mxu0 0.0
    %179 = vmatprep.subr.mxu0 0.0
    %180 = vmatpush1.msra.mxu0 0.0
    %181 = vmatprep.subr.mxu0 0.0
    %182 = vmatpush1.msra.mxu0 0.0
    %183 = vmatprep.subr.mxu0 0.0
    %184 = vmatpush1.msra.mxu0 0.0
    %185 = vmatprep.subr.mxu0 0.0
    %186 = vmatpush1.msra.mxu0 0.0
    %187 = vmatprep.subr.mxu0 0.0
    %188 = vmatpush1.msra.mxu0 0.0
    %189 = vmatprep.subr.mxu0 0.0
    %190 = vmatpush1.msra.mxu0 0.0
    %191 = vmatprep.subr.mxu0 0.0
    %192 = vmatpush1.msra.mxu0 0.0
    %193 = vmatprep.subr.mxu0 0.0
    %194 = vmatpush1.msra.mxu0 0.0
    %195 = vmatprep.subr.mxu0 0.0
    %196 = vmatpush1.msra.mxu0 0.0
    %197 = vmatprep.subr.mxu0 0.0
    %198 = vmatpush1.msra.mxu0 0.0
    %199 = vmatprep.subr.mxu0 0.0
    %200 = vmatpush1.msra.mxu0 0.0
    %201 = vmatprep.subr.mxu0 0.0
    %202 = vmatpush1.msra.mxu0 0.0
    %203 = vmatprep.subr.mxu0 0.0
    %204 = vmatpush1.msra.mxu0 0.0
    %205 = vmatprep.subr.mxu0 0.0
    %206 = vmatpush1.msra.mxu0 0.0
    %207 = vmatprep.subr.mxu0 0.0
    %208 = vmatpush1.msra.mxu0 0.0
    %209 = vmatprep.subr.mxu0 0.0
    %210 = vmatpush1.msra.mxu0 0.0
    %211 = vmatprep.subr.mxu0 0.0
    %212 = vmatpush1.msra.mxu0 0.0
    %213 = vmatprep.subr.mxu0 0.0
    %214 = vmatpush1.msra.mxu0 0.0
    %215 = vmatprep.subr.mxu0 0.0
    %216 = vmatpush1.msra.mxu0 0.0
    %217 = vmatprep.mubr.f32.mxu0 0.0
    %218 = vmatmul.mubr.f32.gmra.mrb[0].mxu0 %v142
    %v219 = vpop.f32.mrb[0].mxu0
    %v220 = vadd.f32 %v138, %v219
    %v221 = vpop.f32.mrb[0].mxu0
    %222 = vmatprep.mubr.f32.mxu0 0.0
    %223 = vmatmul.mubr.f32.gmra.mrb[0].mxu0 %v145
    %v224 = vpop.f32.mrb[0].mxu0
    %v225 = vadd.f32 %v138, %v224
    %v226 = vpop.f32.mrb[0].mxu0
    %227 = vmatprep.mubr.f32.mxu0 0.0
    %228 = vmatmul.mubr.f32.gmra.mrb[0].mxu0 %v148
    %v229 = vpop.f32.mrb[0].mxu0
    %v230 = vadd.f32 %v138, %v229
    %v231 = vpop.f32.mrb[0].mxu0
    %232 = vmatprep.mubr.f32.mxu0 0.0
    %233 = vmatmul.mubr.f32.gmra.mrb[0].mxu0 %v151
    %v234 = vpop.f32.mrb[0].mxu0
    %v235 = vadd.f32 %v138, %v234
    %v236 = vpop.f32.mrb[0].mxu0
    %237 = vdwg.mxu0
    %v238 = vadd.f32 %v220, %v225
    %v239 = vadd.f32 %v238, %v230
    %v240 = vadd.f32 %v239, %v235
    %v241 = vrot.slane %v240, 4
    %v242 = vadd.f32 %v240, %v241
    %v243 = vrot.slane %v242, 2
    %v244 = vadd.f32 %v242, %v243
    %v245 = vrot.slane %v244, 1
    %v246 = vadd.f32 %v244, %v245
    %v247 = vmul.f32 %v246, 0.03125
    %v248 = vsub.f32 %v220, %v247
    %v249 = vsub.f32 %v225, %v247
    %v250 = vsub.f32 %v230, %v247
    %v251 = vsub.f32 %v235, %v247
    %v252 = vmul.f32 %v248, %v248
    %v253 = vmul.f32 %v249, %v249
    %v254 = vmul.f32 %v250, %v250
    %v255 = vmul.f32 %v251, %v251
    %v256 = vadd.f32 %v252, %v253
    %v257 = vadd.f32 %v256, %v254
    %v258 = vadd.f32 %v257, %v255
    %v259 = vrot.slane %v258, 4
    %v260 = vadd.f32 %v258, %v259
    %v261 = vrot.slane %v260, 2
    %v262 = vadd.f32 %v260, %v261
    %v263 = vrot.slane %v262, 1
    %v264 = vadd.f32 %v262, %v263
    %v265 = vmul.f32 %v264, 0.03125
    %v266 = vld [vmem:[%s4] sm:$0x1]
    %v267 = vadd.f32 %v265, 1e-05
    %v268 = vrsqrt.pop %v267
    %v269 = vmul.f32 %v266, %v268
    %v271 = vlaneseq
    %v272 = vshrl.u32 %v271, 7
    %v273 = vsub.s32 0, %v272
    %v274 = vrot.slane %v269, %v273
    %v276 = vmul.f32 %v248, %v274
    %v277 = vmul.f32 %v249, %v274
    %v278 = vmul.f32 %v250, %v274
    %v279 = vmul.f32 %v251, %v274
    %v280 = vld [vmem:[%s5] sm:$0x1]
    %v282 = vlaneseq
    %v283 = vshrl.u32 %v282, 7
    %v284 = vsub.s32 0, %v283
    %v285 = vrot.slane %v280, %v284
    %v287 = vadd.f32 %v276, %v285
    %v288 = vadd.f32 %v277, %v285
    %v289 = vadd.f32 %v278, %v285
    %v290 = vadd.f32 %v279, %v285
    %v291 = vmax.f32 %v287, 0.0
    %v292 = vmax.f32 %v288, 0.0
    %v293 = vmax.f32 %v289, 0.0
    %v294 = vmax.f32 %v290, 0.0
    %s295 = scalar_lea.vmem %s2, 128
    %v296 = vld [vmem:[%s295] sm:$0xff]
    %v297 = vld [vmem:[%s295 + $0x8] sm:$0xff]
    %v298 = vld [vmem:[%s295 + $0x10] sm:$0xff]
    %v299 = vld [vmem:[%s295 + $0x18] sm:$0xff]
    %v300 = vld [vmem:[%s295 + $0x20] sm:$0xff]
    %v301 = vld [vmem:[%s295 + $0x28] sm:$0xff]
    %v302 = vld [vmem:[%s295 + $0x30] sm:$0xff]
    %v303 = vld [vmem:[%s295 + $0x38] sm:$0xff]
    %v304 = vld [vmem:[%s295 + $0x40] sm:$0xff]
    %v305 = vld [vmem:[%s295 + $0x48] sm:$0xff]
    %v306 = vld [vmem:[%s295 + $0x50] sm:$0xff]
    %v307 = vld [vmem:[%s295 + $0x58] sm:$0xff]
    %v308 = vld [vmem:[%s295 + $0x60] sm:$0xff]
    %v309 = vld [vmem:[%s295 + $0x68] sm:$0xff]
    %v310 = vld [vmem:[%s295 + $0x70] sm:$0xff]
    %v311 = vld [vmem:[%s295 + $0x78] sm:$0xff]
    %312 = vmatprep.subr.mxu0 0.0
    %313 = vmatpush1.msra.mxu0 %v296
    %314 = vmatprep.subr.mxu0 0.0
    %315 = vmatpush1.msra.mxu0 %v297
    %316 = vmatprep.subr.mxu0 0.0
    %317 = vmatpush1.msra.mxu0 %v298
    %318 = vmatprep.subr.mxu0 0.0
    %319 = vmatpush1.msra.mxu0 %v299
    %320 = vmatprep.subr.mxu0 0.0
    %321 = vmatpush1.msra.mxu0 %v300
    %322 = vmatprep.subr.mxu0 0.0
    %323 = vmatpush1.msra.mxu0 %v301
    %324 = vmatprep.subr.mxu0 0.0
    %325 = vmatpush1.msra.mxu0 %v302
    %326 = vmatprep.subr.mxu0 0.0
    %327 = vmatpush1.msra.mxu0 %v303
    %328 = vmatprep.subr.mxu0 0.0
    %329 = vmatpush1.msra.mxu0 %v304
    %330 = vmatprep.subr.mxu0 0.0
    %331 = vmatpush1.msra.mxu0 %v305
    %332 = vmatprep.subr.mxu0 0.0
    %333 = vmatpush1.msra.mxu0 %v306
    %334 = vmatprep.subr.mxu0 0.0
    %335 = vmatpush1.msra.mxu0 %v307
    %336 = vmatprep.subr.mxu0 0.0
    %337 = vmatpush1.msra.mxu0 %v308
    %338 = vmatprep.subr.mxu0 0.0
    %339 = vmatpush1.msra.mxu0 %v309
    %340 = vmatprep.subr.mxu0 0.0
    %341 = vmatpush1.msra.mxu0 %v310
    %342 = vmatprep.subr.mxu0 0.0
    %343 = vmatpush1.msra.mxu0 %v311
    %344 = vmatprep.subr.mxu0 0.0
    %345 = vmatpush1.msra.mxu0 0.0
    %346 = vmatprep.subr.mxu0 0.0
    %347 = vmatpush1.msra.mxu0 0.0
    %348 = vmatprep.subr.mxu0 0.0
    %349 = vmatpush1.msra.mxu0 0.0
    %350 = vmatprep.subr.mxu0 0.0
    %351 = vmatpush1.msra.mxu0 0.0
    %352 = vmatprep.subr.mxu0 0.0
    %353 = vmatpush1.msra.mxu0 0.0
    %354 = vmatprep.subr.mxu0 0.0
    %355 = vmatpush1.msra.mxu0 0.0
    %356 = vmatprep.subr.mxu0 0.0
    %357 = vmatpush1.msra.mxu0 0.0
    %358 = vmatprep.subr.mxu0 0.0
    %359 = vmatpush1.msra.mxu0 0.0
    %360 = vmatprep.subr.mxu0 0.0
    %361 = vmatpush1.msra.mxu0 0.0
    %362 = vmatprep.subr.mxu0 0.0
    %363 = vmatpush1.msra.mxu0 0.0
    %364 = vmatprep.subr.mxu0 0.0
    %365 = vmatpush1.msra.mxu0 0.0
    %366 = vmatprep.subr.mxu0 0.0
    %367 = vmatpush1.msra.mxu0 0.0
    %368 = vmatprep.subr.mxu0 0.0
    %369 = vmatpush1.msra.mxu0 0.0
    %370 = vmatprep.subr.mxu0 0.0
    %371 = vmatpush1.msra.mxu0 0.0
    %372 = vmatprep.subr.mxu0 0.0
    %373 = vmatpush1.msra.mxu0 0.0
    %374 = vmatprep.subr.mxu0 0.0
    %375 = vmatpush1.msra.mxu0 0.0
    %376 = vmatprep.mubr.f32.mxu0 0.0
    %377 = vmatmul.mubr.f32.gmra.mrb[0].mxu0 %v291
    %v378 = vpop.f32.mrb[0].mxu0
    %v379 = vadd.f32 0.0, %v378
    %v380 = vpop.f32.mrb[0].mxu0
    %381 = vmatprep.mubr.f32.mxu0 0.0
    %382 = vmatmul.mubr.f32.gmra.mrb[0].mxu0 %v292
    %v383 = vpop.f32.mrb[0].mxu0
    %v384 = vadd.f32 0.0, %v383
    %v385 = vpop.f32.mrb[0].mxu0
    %386 = vmatprep.mubr.f32.mxu0 0.0
    %387 = vmatmul.mubr.f32.gmra.mrb[0].mxu0 %v293
    %v388 = vpop.f32.mrb[0].mxu0
    %v389 = vadd.f32 0.0, %v388
    %v390 = vpop.f32.mrb[0].mxu0
    %391 = vmatprep.mubr.f32.mxu0 0.0
    %392 = vmatmul.mubr.f32.gmra.mrb[0].mxu0 %v294
    %v393 = vpop.f32.mrb[0].mxu0
    %v394 = vadd.f32 0.0, %v393
    %v395 = vpop.f32.mrb[0].mxu0
    %396 = vdwg.mxu0
    %s397 = scalar_lea.vmem %s3, 1
    %v398 = vld [vmem:[%s397] sm:$0x1]
    %v400 = vlaneseq
    %v401 = vshrl.u32 %v400, 7
    %v402 = vsub.s32 0, %v401
    %v403 = vrot.slane %v398, %v402
    %405 = vmatprep.subr.mxu0 0.0
    %406 = vmatpush1.msra.mxu0 %v379
    %407 = vmatprep.subr.mxu0 0.0
    %408 = vmatpush1.msra.mxu0 %v384
    %409 = vmatprep.subr.mxu0 0.0
    %410 = vmatpush1.msra.mxu0 %v389
    %411 = vmatprep.subr.mxu0 0.0
    %412 = vmatpush1.msra.mxu0 %v394
    %413 = vmatprep.subr.mxu0 0.0
    %414 = vmatpush1.msra.mxu0 0.0
    %415 = vmatprep.subr.mxu0 0.0
    %416 = vmatpush1.msra.mxu0 0.0
    %417 = vmatprep.subr.mxu0 0.0
    %418 = vmatpush1.msra.mxu0 0.0
    %419 = vmatprep.subr.mxu0 0.0
    %420 = vmatpush1.msra.mxu0 0.0
    %421 = vmatprep.subr.mxu0 0.0
    %422 = vmatpush1.msra.mxu0 0.0
    %423 = vmatprep.subr.mxu0 0.0
    %424 = vmatpush1.msra.mxu0 0.0
    %425 = vmatprep.subr.mxu0 0.0
    %426 = vmatpush1.msra.mxu0 0.0
    %427 = vmatprep.subr.mxu0 0.0
    %428 = vmatpush1.msra.mxu0 0.0
    %429 = vmatprep.subr.mxu0 0.0
    %430 = vmatpush1.msra.mxu0 0.0
    %431 = vmatprep.subr.mxu0 0.0
    %432 = vmatpush1.msra.mxu0 0.0
    %433 = vmatprep.subr.mxu0 0.0
    %434 = vmatpush1.msra.mxu0 0.0
    %435 = vmatprep.subr.mxu0 0.0
    %436 = vmatpush1.msra.mxu0 0.0
    %437 = vmatprep.subr.mxu0 0.0
    %438 = vmatpush1.msra.mxu0 0.0
    %439 = vmatprep.subr.mxu0 0.0
    %440 = vmatpush1.msra.mxu0 0.0
    %441 = vmatprep.subr.mxu0 0.0
    %442 = vmatpush1.msra.mxu0 0.0
    %443 = vmatprep.subr.mxu0 0.0
    %444 = vmatpush1.msra.mxu0 0.0
    %445 = vmatprep.subr.mxu0 0.0
    %446 = vmatpush1.msra.mxu0 0.0
    %447 = vmatprep.subr.mxu0 0.0
    %448 = vmatpush1.msra.mxu0 0.0
    %449 = vmatprep.subr.mxu0 0.0
    %450 = vmatpush1.msra.mxu0 0.0
    %451 = vmatprep.subr.mxu0 0.0
    %452 = vmatpush1.msra.mxu0 0.0
    %453 = vmatprep.subr.mxu0 0.0
    %454 = vmatpush1.msra.mxu0 0.0
    %455 = vmatprep.subr.mxu0 0.0
    %456 = vmatpush1.msra.mxu0 0.0
    %457 = vmatprep.subr.mxu0 0.0
    %458 = vmatpush1.msra.mxu0 0.0
    %459 = vmatprep.subr.mxu0 0.0
    %460 = vmatpush1.msra.mxu0 0.0
    %461 = vmatprep.subr.mxu0 0.0
    %462 = vmatpush1.msra.mxu0 0.0
    %463 = vmatprep.subr.mxu0 0.0
    %464 = vmatpush1.msra.mxu0 0.0
    %465 = vmatprep.subr.mxu0 0.0
    %466 = vmatpush1.msra.mxu0 0.0
    %467 = vmatprep.subr.mxu0 0.0
    %468 = vmatpush1.msra.mxu0 0.0
    %469 = vmatprep.mubr.f32.mxu0 0.0
    %470 = vmatmul.mubr.f32.gmra.mrb[0].mxu0 %v142
    %v471 = vpop.f32.mrb[0].mxu0
    %v472 = vadd.f32 %v403, %v471
    %v473 = vpop.f32.mrb[0].mxu0
    %474 = vmatprep.mubr.f32.mxu0 0.0
    %475 = vmatmul.mubr.f32.gmra.mrb[0].mxu0 %v145
    %v476 = vpop.f32.mrb[0].mxu0
    %v477 = vadd.f32 %v403, %v476
    %v478 = vpop.f32.mrb[0].mxu0
    %479 = vmatprep.mubr.f32.mxu0 0.0
    %480 = vmatmul.mubr.f32.gmra.mrb[0].mxu0 %v148
    %v481 = vpop.f32.mrb[0].mxu0
    %v482 = vadd.f32 %v403, %v481
    %v483 = vpop.f32.mrb[0].mxu0
    %484 = vmatprep.mubr.f32.mxu0 0.0
    %485 = vmatmul.mubr.f32.gmra.mrb[0].mxu0 %v151
    %v486 = vpop.f32.mrb[0].mxu0
    %v487 = vadd.f32 %v403, %v486
    %v488 = vpop.f32.mrb[0].mxu0
    %489 = vdwg.mxu0
    %v490 = vadd.f32 %v472, %v477
    %v491 = vadd.f32 %v490, %v482
    %v492 = vadd.f32 %v491, %v487
    %v493 = vrot.slane %v492, 4
    %v494 = vadd.f32 %v492, %v493
    %v495 = vrot.slane %v494, 2
    %v496 = vadd.f32 %v494, %v495
    %v497 = vrot.slane %v496, 1
    %v498 = vadd.f32 %v496, %v497
    %v499 = vmul.f32 %v498, 0.03125
    %v500 = vsub.f32 %v472, %v499
    %v501 = vsub.f32 %v477, %v499
    %v502 = vsub.f32 %v482, %v499
    %v503 = vsub.f32 %v487, %v499
    %v504 = vmul.f32 %v500, %v500
    %v505 = vmul.f32 %v501, %v501
    %v506 = vmul.f32 %v502, %v502
    %v507 = vmul.f32 %v503, %v503
    %v508 = vadd.f32 %v504, %v505
    %v509 = vadd.f32 %v508, %v506
    %v510 = vadd.f32 %v509, %v507
    %v511 = vrot.slane %v510, 4
    %v512 = vadd.f32 %v510, %v511
    %v513 = vrot.slane %v512, 2
    %v514 = vadd.f32 %v512, %v513
    %v515 = vrot.slane %v514, 1
    %v516 = vadd.f32 %v514, %v515
    %v517 = vmul.f32 %v516, 0.03125
    %s518 = scalar_lea.vmem %s4, 1
    %v519 = vld [vmem:[%s518] sm:$0x1]
    %v520 = vadd.f32 %v517, 1e-05
    %v521 = vrsqrt.pop %v520
    %v522 = vmul.f32 %v519, %v521
    %v524 = vlaneseq
    %v525 = vshrl.u32 %v524, 7
    %v526 = vsub.s32 0, %v525
    %v527 = vrot.slane %v522, %v526
    %v529 = vmul.f32 %v500, %v527
    %v530 = vmul.f32 %v501, %v527
    %v531 = vmul.f32 %v502, %v527
    %v532 = vmul.f32 %v503, %v527
    %s533 = scalar_lea.vmem %s5, 1
    %v534 = vld [vmem:[%s533] sm:$0x1]
    %v536 = vlaneseq
    %v537 = vshrl.u32 %v536, 7
    %v538 = vsub.s32 0, %v537
    %v539 = vrot.slane %v534, %v538
    %v541 = vadd.f32 %v529, %v539
    %v542 = vadd.f32 %v530, %v539
    %v543 = vadd.f32 %v531, %v539
    %v544 = vadd.f32 %v532, %v539
    %v545 = vmax.f32 %v541, 0.0
    %v546 = vmax.f32 %v542, 0.0
    %v547 = vmax.f32 %v543, 0.0
    %v548 = vmax.f32 %v544, 0.0
    %s549 = scalar_lea.vmem %s2, 256
    %v550 = vld [vmem:[%s549] sm:$0xff]
    %v551 = vld [vmem:[%s549 + $0x8] sm:$0xff]
    %v552 = vld [vmem:[%s549 + $0x10] sm:$0xff]
    %v553 = vld [vmem:[%s549 + $0x18] sm:$0xff]
    %v554 = vld [vmem:[%s549 + $0x20] sm:$0xff]
    %v555 = vld [vmem:[%s549 + $0x28] sm:$0xff]
    %v556 = vld [vmem:[%s549 + $0x30] sm:$0xff]
    %v557 = vld [vmem:[%s549 + $0x38] sm:$0xff]
    %v558 = vld [vmem:[%s549 + $0x40] sm:$0xff]
    %v559 = vld [vmem:[%s549 + $0x48] sm:$0xff]
    %v560 = vld [vmem:[%s549 + $0x50] sm:$0xff]
    %v561 = vld [vmem:[%s549 + $0x58] sm:$0xff]
    %v562 = vld [vmem:[%s549 + $0x60] sm:$0xff]
    %v563 = vld [vmem:[%s549 + $0x68] sm:$0xff]
    %v564 = vld [vmem:[%s549 + $0x70] sm:$0xff]
    %v565 = vld [vmem:[%s549 + $0x78] sm:$0xff]
    %566 = vmatprep.subr.mxu0 0.0
    %567 = vmatpush1.msra.mxu0 %v550
    %568 = vmatprep.subr.mxu0 0.0
    %569 = vmatpush1.msra.mxu0 %v551
    %570 = vmatprep.subr.mxu0 0.0
    %571 = vmatpush1.msra.mxu0 %v552
    %572 = vmatprep.subr.mxu0 0.0
    %573 = vmatpush1.msra.mxu0 %v553
    %574 = vmatprep.subr.mxu0 0.0
    %575 = vmatpush1.msra.mxu0 %v554
    %576 = vmatprep.subr.mxu0 0.0
    %577 = vmatpush1.msra.mxu0 %v555
    %578 = vmatprep.subr.mxu0 0.0
    %579 = vmatpush1.msra.mxu0 %v556
    %580 = vmatprep.subr.mxu0 0.0
    %581 = vmatpush1.msra.mxu0 %v557
    %582 = vmatprep.subr.mxu0 0.0
    %583 = vmatpush1.msra.mxu0 %v558
    %584 = vmatprep.subr.mxu0 0.0
    %585 = vmatpush1.msra.mxu0 %v559
    %586 = vmatprep.subr.mxu0 0.0
    %587 = vmatpush1.msra.mxu0 %v560
    %588 = vmatprep.subr.mxu0 0.0
    %589 = vmatpush1.msra.mxu0 %v561
    %590 = vmatprep.subr.mxu0 0.0
    %591 = vmatpush1.msra.mxu0 %v562
    %592 = vmatprep.subr.mxu0 0.0
    %593 = vmatpush1.msra.mxu0 %v563
    %594 = vmatprep.subr.mxu0 0.0
    %595 = vmatpush1.msra.mxu0 %v564
    %596 = vmatprep.subr.mxu0 0.0
    %597 = vmatpush1.msra.mxu0 %v565
    %598 = vmatprep.subr.mxu0 0.0
    %599 = vmatpush1.msra.mxu0 0.0
    %600 = vmatprep.subr.mxu0 0.0
    %601 = vmatpush1.msra.mxu0 0.0
    %602 = vmatprep.subr.mxu0 0.0
    %603 = vmatpush1.msra.mxu0 0.0
    %604 = vmatprep.subr.mxu0 0.0
    %605 = vmatpush1.msra.mxu0 0.0
    %606 = vmatprep.subr.mxu0 0.0
    %607 = vmatpush1.msra.mxu0 0.0
    %608 = vmatprep.subr.mxu0 0.0
    %609 = vmatpush1.msra.mxu0 0.0
    %610 = vmatprep.subr.mxu0 0.0
    %611 = vmatpush1.msra.mxu0 0.0
    %612 = vmatprep.subr.mxu0 0.0
    %613 = vmatpush1.msra.mxu0 0.0
    %614 = vmatprep.subr.mxu0 0.0
    %615 = vmatpush1.msra.mxu0 0.0
    %616 = vmatprep.subr.mxu0 0.0
    %617 = vmatpush1.msra.mxu0 0.0
    %618 = vmatprep.subr.mxu0 0.0
    %619 = vmatpush1.msra.mxu0 0.0
    %620 = vmatprep.subr.mxu0 0.0
    %621 = vmatpush1.msra.mxu0 0.0
    %622 = vmatprep.subr.mxu0 0.0
    %623 = vmatpush1.msra.mxu0 0.0
    %624 = vmatprep.subr.mxu0 0.0
    %625 = vmatpush1.msra.mxu0 0.0
    %626 = vmatprep.subr.mxu0 0.0
    %627 = vmatpush1.msra.mxu0 0.0
    %628 = vmatprep.subr.mxu0 0.0
    %629 = vmatpush1.msra.mxu0 0.0
    %630 = vmatprep.mubr.f32.mxu0 0.0
    %631 = vmatmul.mubr.f32.gmra.mrb[0].mxu0 %v545
    %v632 = vpop.f32.mrb[0].mxu0
    %v633 = vadd.f32 0.0, %v632
    %v634 = vpop.f32.mrb[0].mxu0
    %635 = vmatprep.mubr.f32.mxu0 0.0
    %636 = vmatmul.mubr.f32.gmra.mrb[0].mxu0 %v546
    %v637 = vpop.f32.mrb[0].mxu0
    %v638 = vadd.f32 0.0, %v637
    %v639 = vpop.f32.mrb[0].mxu0
    %640 = vmatprep.mubr.f32.mxu0 0.0
    %641 = vmatmul.mubr.f32.gmra.mrb[0].mxu0 %v547
    %v642 = vpop.f32.mrb[0].mxu0
    %v643 = vadd.f32 0.0, %v642
    %v644 = vpop.f32.mrb[0].mxu0
    %645 = vmatprep.mubr.f32.mxu0 0.0
    %646 = vmatmul.mubr.f32.gmra.mrb[0].mxu0 %v548
    %v647 = vpop.f32.mrb[0].mxu0
    %v648 = vadd.f32 0.0, %v647
    %v649 = vpop.f32.mrb[0].mxu0
    %650 = vdwg.mxu0
    %s651 = scalar_lea.vmem %s3, 2
    %v652 = vld [vmem:[%s651] sm:$0x1]
    %v654 = vlaneseq
    %v655 = vshrl.u32 %v654, 7
    %v656 = vsub.s32 0, %v655
    %v657 = vrot.slane %v652, %v656
    %659 = vmatprep.subr.mxu0 0.0
    %660 = vmatpush1.msra.mxu0 %v633
    %661 = vmatprep.subr.mxu0 0.0
    %662 = vmatpush1.msra.mxu0 %v638
    %663 = vmatprep.subr.mxu0 0.0
    %664 = vmatpush1.msra.mxu0 %v643
    %665 = vmatprep.subr.mxu0 0.0
    %666 = vmatpush1.msra.mxu0 %v648
    %667 = vmatprep.subr.mxu0 0.0
    %668 = vmatpush1.msra.mxu0 0.0
    %669 = vmatprep.subr.mxu0 0.0
    %670 = vmatpush1.msra.mxu0 0.0
    %671 = vmatprep.subr.mxu0 0.0
    %672 = vmatpush1.msra.mxu0 0.0
    %673 = vmatprep.subr.mxu0 0.0
    %674 = vmatpush1.msra.mxu0 0.0
    %675 = vmatprep.subr.mxu0 0.0
    %676 = vmatpush1.msra.mxu0 0.0
    %677 = vmatprep.subr.mxu0 0.0
    %678 = vmatpush1.msra.mxu0 0.0
    %679 = vmatprep.subr.mxu0 0.0
    %680 = vmatpush1.msra.mxu0 0.0
    %681 = vmatprep.subr.mxu0 0.0
    %682 = vmatpush1.msra.mxu0 0.0
    %683 = vmatprep.subr.mxu0 0.0
    %684 = vmatpush1.msra.mxu0 0.0
    %685 = vmatprep.subr.mxu0 0.0
    %686 = vmatpush1.msra.mxu0 0.0
    %687 = vmatprep.subr.mxu0 0.0
    %688 = vmatpush1.msra.mxu0 0.0
    %689 = vmatprep.subr.mxu0 0.0
    %690 = vmatpush1.msra.mxu0 0.0
    %691 = vmatprep.subr.mxu0 0.0
    %692 = vmatpush1.msra.mxu0 0.0
    %693 = vmatprep.subr.mxu0 0.0
    %694 = vmatpush1.msra.mxu0 0.0
    %695 = vmatprep.subr.mxu0 0.0
    %696 = vmatpush1.msra.mxu0 0.0
    %697 = vmatprep.subr.mxu0 0.0
    %698 = vmatpush1.msra.mxu0 0.0
    %699 = vmatprep.subr.mxu0 0.0
    %700 = vmatpush1.msra.mxu0 0.0
    %701 = vmatprep.subr.mxu0 0.0
    %702 = vmatpush1.msra.mxu0 0.0
    %703 = vmatprep.subr.mxu0 0.0
    %704 = vmatpush1.msra.mxu0 0.0
    %705 = vmatprep.subr.mxu0 0.0
    %706 = vmatpush1.msra.mxu0 0.0
    %707 = vmatprep.subr.mxu0 0.0
    %708 = vmatpush1.msra.mxu0 0.0
    %709 = vmatprep.subr.mxu0 0.0
    %710 = vmatpush1.msra.mxu0 0.0
    %711 = vmatprep.subr.mxu0 0.0
    %712 = vmatpush1.msra.mxu0 0.0
    %713 = vmatprep.subr.mxu0 0.0
    %714 = vmatpush1.msra.mxu0 0.0
    %715 = vmatprep.subr.mxu0 0.0
    %716 = vmatpush1.msra.mxu0 0.0
    %717 = vmatprep.subr.mxu0 0.0
    %718 = vmatpush1.msra.mxu0 0.0
    %719 = vmatprep.subr.mxu0 0.0
    %720 = vmatpush1.msra.mxu0 0.0
    %721 = vmatprep.subr.mxu0 0.0
    %722 = vmatpush1.msra.mxu0 0.0
    %723 = vmatprep.mubr.f32.mxu0 0.0
    %724 = vmatmul.mubr.f32.gmra.mrb[0].mxu0 %v142
    %v725 = vpop.f32.mrb[0].mxu0
    %v726 = vadd.f32 %v657, %v725
    %v727 = vpop.f32.mrb[0].mxu0
    %728 = vmatprep.mubr.f32.mxu0 0.0
    %729 = vmatmul.mubr.f32.gmra.mrb[0].mxu0 %v145
    %v730 = vpop.f32.mrb[0].mxu0
    %v731 = vadd.f32 %v657, %v730
    %v732 = vpop.f32.mrb[0].mxu0
    %733 = vmatprep.mubr.f32.mxu0 0.0
    %734 = vmatmul.mubr.f32.gmra.mrb[0].mxu0 %v148
    %v735 = vpop.f32.mrb[0].mxu0
    %v736 = vadd.f32 %v657, %v735
    %v737 = vpop.f32.mrb[0].mxu0
    %738 = vmatprep.mubr.f32.mxu0 0.0
    %739 = vmatmul.mubr.f32.gmra.mrb[0].mxu0 %v151
    %v740 = vpop.f32.mrb[0].mxu0
    %v741 = vadd.f32 %v657, %v740
    %v742 = vpop.f32.mrb[0].mxu0
    %743 = vdwg.mxu0
    %v744 = vadd.f32 %v726, %v731
    %v745 = vadd.f32 %v744, %v736
    %v746 = vadd.f32 %v745, %v741
    %v747 = vrot.slane %v746, 4
    %v748 = vadd.f32 %v746, %v747
    %v749 = vrot.slane %v748, 2
    %v750 = vadd.f32 %v748, %v749
    %v751 = vrot.slane %v750, 1
    %v752 = vadd.f32 %v750, %v751
    %v753 = vmul.f32 %v752, 0.03125
    %v754 = vsub.f32 %v726, %v753
    %v755 = vsub.f32 %v731, %v753
    %v756 = vsub.f32 %v736, %v753
    %v757 = vsub.f32 %v741, %v753
    %v758 = vmul.f32 %v754, %v754
    %v759 = vmul.f32 %v755, %v755
    %v760 = vmul.f32 %v756, %v756
    %v761 = vmul.f32 %v757, %v757
    %v762 = vadd.f32 %v758, %v759
    %v763 = vadd.f32 %v762, %v760
    %v764 = vadd.f32 %v763, %v761
    %v765 = vrot.slane %v764, 4
    %v766 = vadd.f32 %v764, %v765
    %v767 = vrot.slane %v766, 2
    %v768 = vadd.f32 %v766, %v767
    %v769 = vrot.slane %v768, 1
    %v770 = vadd.f32 %v768, %v769
    %v771 = vmul.f32 %v770, 0.03125
    %s772 = scalar_lea.vmem %s4, 2
    %v773 = vld [vmem:[%s772] sm:$0x1]
    %v774 = vadd.f32 %v771, 1e-05
    %v775 = vrsqrt.pop %v774
    %v776 = vmul.f32 %v773, %v775
    %v778 = vlaneseq
    %v779 = vshrl.u32 %v778, 7
    %v780 = vsub.s32 0, %v779
    %v781 = vrot.slane %v776, %v780
    %v783 = vmul.f32 %v754, %v781
    %v784 = vmul.f32 %v755, %v781
    %v785 = vmul.f32 %v756, %v781
    %v786 = vmul.f32 %v757, %v781
    %s787 = scalar_lea.vmem %s5, 2
    %v788 = vld [vmem:[%s787] sm:$0x1]
    %v790 = vlaneseq
    %v791 = vshrl.u32 %v790, 7
    %v792 = vsub.s32 0, %v791
    %v793 = vrot.slane %v788, %v792
    %v795 = vadd.f32 %v783, %v793
    %v796 = vadd.f32 %v784, %v793
    %v797 = vadd.f32 %v785, %v793
    %v798 = vadd.f32 %v786, %v793
    %v799 = vmax.f32 %v795, 0.0
    %v800 = vmax.f32 %v796, 0.0
    %v801 = vmax.f32 %v797, 0.0
    %v802 = vmax.f32 %v798, 0.0
    %803 = vst [vmem:[#allocation2] sm:$0xff] %v799
    %804 = vst [vmem:[#allocation2 + $0x8] sm:$0xff] %v800
    %805 = vst [vmem:[#allocation2 + $0x10] sm:$0xff] %v801
    %806 = vst [vmem:[#allocation2 + $0x18] sm:$0xff] %v802
    // Predicated region
    $region26: #{weighted_gcn_block_forward.1} parent=1 // pred_check
      _
    $region27: #{weighted_gcn_block_forward.1} parent=1 // pred_check_branch
      %808 = sbr.rel (0) target = $region29
    $region28: #{weighted_gcn_block_forward.1} parent=1 // pred_region
      %s810 = ssub.s32 512, 512
      %811 = vsyncadd [#allocation3], %s810
      %s812 = sshll.u32 [#allocation2], 4
      %s813 = int_to_ptr.vmem [resolvable:$true] %s812
      %818 = dma.vmem_to_hbm [thread:$0]  %s813, 512, %s6, [#allocation3], 128, 128, 8
    $region29: #{weighted_gcn_block_forward.1} parent=1 // pred_fallthru
      _
    // Predicated region
    $region30: #{weighted_gcn_block_forward.1} parent=1 // pred_check
      _
    $region31: #{weighted_gcn_block_forward.1} parent=1 // pred_check_branch
      %820 = sbr.rel (0) target = $region33
    $region32: #{weighted_gcn_block_forward.1} parent=1 // pred_region
      %821 = dma.done [#allocation3], 512
    $region33: #{weighted_gcn_block_forward.1} parent=1 // pred_fallthru
      _
    %822 = vsyncpa [#allocation3], 1

</llo_original>
